<compile_context>
chip_gen: v7x
topology: tpu7x:2x2x1
jax: 0.10.0
libtpu: 0.0.40
codegen_flags: <defaults>
</compile_context>

<pallas_src>
import functools

import jax
import jax.numpy as jnp
import numpy as np
from jax import lax
from jax.experimental import pallas as pl
from jax.experimental.pallas import tpu as pltpu

_NEG = -1e30  # large-negative sentinel (avoids inf-inf NaNs on masked lanes)


# ----------------------------------------------------------------------------
# CLIP contrastive loss
#   sim_i2t = scale * img @ txt.T ; sim_t2i = scale * txt @ img.T
#   loss = 0.5 * ( CE(sim_i2t, arange(B)) + CE(sim_t2i, arange(B)) )
# Row-tiled: each grid step handles tm rows of both directions and writes a
# partial sum of per-row CE terms.
# ----------------------------------------------------------------------------
def _clip_loss_kernel(scale_ref, imgt_ref, txtt_ref, img_ref, txt_ref, out_ref,
                      *, batch):
    i = pl.program_id(0)
    tm = imgt_ref.shape[0]
    scale = scale_ref[0]

    img_t = imgt_ref[...]                                   # (tm, D) input dtype
    txt_t = txtt_ref[...]                                   # (tm, D)

    # Fold the logit scale into the small row tiles (O(tm*D), not O(B^2)).
    a_img = (img_t.astype(jnp.float32) * scale).astype(img_t.dtype)
    a_txt = (txt_t.astype(jnp.float32) * scale).astype(txt_t.dtype)

    # image->text logits for these rows: (tm, B); lane-axis softmax.
    sim_i = lax.dot_general(a_img, txt_ref[...], (((1,), (1,)), ((), ())),
                            preferred_element_type=jnp.float32)
    # text->image logits for the same rows: (tm, B); lane-axis softmax.
    sim_t = lax.dot_general(a_txt, img_ref[...], (((1,), (1,)), ((), ())),
                            preferred_element_type=jnp.float32)

    # Label logit (diagonal), identical for both directions: scale*<img_i,txt_i>.
    diag = jnp.sum(a_img.astype(jnp.float32) * txt_t.astype(jnp.float32),
                   axis=-1, keepdims=True)                   # (tm, 1)

    m_i = jnp.max(sim_i, axis=-1, keepdims=True)
    lse_i = m_i + jnp.log(jnp.sum(jnp.exp(sim_i - m_i), axis=-1, keepdims=True))
    m_t = jnp.max(sim_t, axis=-1, keepdims=True)
    lse_t = m_t + jnp.log(jnp.sum(jnp.exp(sim_t - m_t), axis=-1, keepdims=True))

    # Mask rows past the true batch (partial last tile).
    row = i * tm + lax.broadcasted_iota(jnp.int32, (tm, 1), 0)
    per_row = jnp.where(row < batch, lse_i + lse_t - 2.0 * diag, 0.0)

    lane = lax.broadcasted_iota(jnp.int32, (1, 1, 128), 2)
    out_ref[...] = jnp.where(lane == 0, jnp.sum(per_row), 0.0)


def clip_contrastive_loss(image_features, text_features, logit_scale):
    B, D = image_features.shape
    tm = B if B <= 256 else 256
    nb = pl.cdiv(B, tm)
    scale = jnp.asarray([logit_scale], dtype=jnp.float32)

    partials = pl.pallas_call(
        functools.partial(_clip_loss_kernel, batch=B),
        out_shape=jax.ShapeDtypeStruct((nb, 1, 128), jnp.float32),
        grid=(nb,),
        in_specs=[
            pl.BlockSpec(memory_space=pltpu.MemorySpace.SMEM),   # logit scale
            pl.BlockSpec((tm, D), lambda i: (i, 0)),             # img row tile
            pl.BlockSpec((tm, D), lambda i: (i, 0)),             # txt row tile
            pl.BlockSpec((B, D), lambda i: (0, 0)),              # img (resident)
            pl.BlockSpec((B, D), lambda i: (0, 0)),              # txt (resident)
        ],
        out_specs=pl.BlockSpec((1, 1, 128), lambda i: (i, 0, 0)),
        compiler_params=pltpu.CompilerParams(
            dimension_semantics=("parallel",)),
    )(scale, image_features, text_features, image_features, text_features)

    return jnp.sum(partials[:, 0, 0]) / (2.0 * B)


# ----------------------------------------------------------------------------
# Caption loss: token-level cross-entropy with ignore_index=pad_id, mean over
# non-pad tokens (== nn.CrossEntropyLoss(ignore_index=pad_id)).
# Grid = (batch, vocab tiles); online logsumexp over vocab tiles; per-batch
# partial (sum, count) written to a lane-dense output row; final divide in JAX.
# ----------------------------------------------------------------------------
def _caption_loss_kernel(logits_ref, labels_ref, out_ref, m_ref, l_ref, t_ref,
                         *, vocab, pad_id):
    v = pl.program_id(1)
    nv = pl.num_programs(1)

    @pl.when(v == 0)
    def _():
        m_ref[...] = jnp.full(m_ref.shape, _NEG, m_ref.dtype)
        l_ref[...] = jnp.zeros(l_ref.shape, l_ref.dtype)
        t_ref[...] = jnp.zeros(t_ref.shape, t_ref.dtype)

    x = logits_ref[0].astype(jnp.float32)                    # (T, tv)
    lab = labels_ref[0]                                      # (T, 1) int32
    T, tv = x.shape

    col = v * tv + lax.broadcasted_iota(jnp.int32, (T, tv), 1)
    x = jnp.where(col < vocab, x, _NEG)                      # mask ragged tile

    m_prev = m_ref[...]
    m_new = jnp.maximum(m_prev, jnp.max(x, axis=-1, keepdims=True))
    l_ref[...] = (l_ref[...] * jnp.exp(m_prev - m_new)
                  + jnp.sum(jnp.exp(x - m_new), axis=-1, keepdims=True))
    t_ref[...] += jnp.sum(jnp.where(col == lab, x, 0.0), axis=-1, keepdims=True)
    m_ref[...] = m_new

    @pl.when(v == nv - 1)
    def _():
        lse = m_ref[...] + jnp.log(l_ref[...])               # (T, 1)
        keep = (lab != pad_id).astype(jnp.float32)
        psum = jnp.sum((lse - t_ref[...]) * keep)
        pcnt = jnp.sum(keep)
        lane = lax.broadcasted_iota(jnp.int32, (1, 1, 128), 2)
        out_ref[...] = jnp.where(lane == 0, psum,
                                 jnp.where(lane == 1, pcnt, 0.0))


def _pick_vocab_tile(T, V, itemsize, budget_bytes=6 * 1024 * 1024):
    # Lane-dense tile that fits comfortably in the default scoped VMEM on
    # v5e/v6e/v7x once double-buffered.
    if V <= 1024:
        return V
    tv = (budget_bytes // (T * itemsize)) // 128 * 128
    tv = max(128, tv)
    if tv >= V:
        return V
    return tv


def caption_cross_entropy(logits, labels, pad_id):
    B, T, V = logits.shape
    tv = _pick_vocab_tile(T, V, jnp.dtype(logits.dtype).itemsize)
    nv = pl.cdiv(V, tv)
    labels3 = labels.astype(jnp.int32).reshape(B, T, 1)

    partials = pl.pallas_call(
        functools.partial(_caption_loss_kernel, vocab=V, pad_id=pad_id),
        out_shape=jax.ShapeDtypeStruct((B, 1, 128), jnp.float32),
        grid=(B, nv),
        in_specs=[
            pl.BlockSpec((1, T, tv), lambda b, v: (b, 0, v)),   # bf16/f32 logits
            pl.BlockSpec((1, T, 1), lambda b, v: (b, 0, 0)),    # labels
        ],
        out_specs=pl.BlockSpec((1, 1, 128), lambda b, v: (b, 0, 0)),
        scratch_shapes=[pltpu.VMEM((T, 1), jnp.float32)] * 3,   # m, l, tgt
        compiler_params=pltpu.CompilerParams(
            dimension_semantics=("parallel", "arbitrary")),
    )(logits, labels3)

    total = jnp.sum(partials[:, 0, 0])
    count = jnp.sum(partials[:, 0, 1])
    return total / count


# ----------------------------------------------------------------------------
# CoCaLoss forward (single device: do_gather path is a no-op without dist).
# ----------------------------------------------------------------------------
# TODO(synk): distributed gather_features / horovod all-gather paths are not
# implemented (single-device semantics match the non-distributed branch).
def coca_loss_forward(image_features, text_features, logits, labels, *,
                      logit_scale, clip_loss_weight, caption_loss_weight,
                      pad_id=0, name="contrastive_loss"):
    if clip_loss_weight:
        clip_loss = clip_loss_weight * clip_contrastive_loss(
            image_features, text_features, logit_scale)
    else:
        clip_loss = jnp.asarray(0.0, dtype=jnp.float32)
    caption_loss = caption_loss_weight * caption_cross_entropy(logits, labels, pad_id)
    return {name: clip_loss, "caption_loss": caption_loss}


if __name__ == "__main__":
    key = jax.random.PRNGKey(0)
    B, D, T, V = 2, 32, 8, 32
    pad_id = 0
    clip_loss_weight = 1.0
    caption_loss_weight = 2.0
    logit_scale = float(np.exp(np.log(1.0 / 0.07)))   # CLIP default logit_scale

    k1, k2, k3, k4 = jax.random.split(key, 4)
    img = jax.random.normal(k1, (B, D), jnp.float32)
    txt = jax.random.normal(k2, (B, D), jnp.float32)
    img = (img / jnp.linalg.norm(img, axis=-1, keepdims=True)).astype(jnp.bfloat16)
    txt = (txt / jnp.linalg.norm(txt, axis=-1, keepdims=True)).astype(jnp.bfloat16)
    logits = jax.random.normal(k3, (B, T, V), jnp.float32).astype(jnp.bfloat16)
    labels = jax.random.randint(k4, (B, T), 0, V, dtype=jnp.int32)

    out = coca_loss_forward(
        img, txt, logits, labels,
        logit_scale=logit_scale,
        clip_loss_weight=clip_loss_weight,
        caption_loss_weight=caption_loss_weight,
        pad_id=pad_id)

    jax.block_until_ready(out)
    print("KERNEL_OK")
</pallas_src>

<mosaic_0001>
module attributes {stable_mosaic.version = 11 : i64} {
  func.func @_clip_loss_kernel(%arg0: i32, %arg1: memref<1xf32, #tpu.memory_space<smem>>, %arg2: memref<2x32xbf16, #tpu.memory_space<vmem>>, %arg3: memref<2x32xbf16, #tpu.memory_space<vmem>>, %arg4: memref<2x32xbf16, #tpu.memory_space<vmem>>, %arg5: memref<2x32xbf16, #tpu.memory_space<vmem>>, %arg6: memref<1x1x128xf32, #tpu.memory_space<vmem>>) attributes {dimension_semantics = [#tpu.dimension_semantics<parallel>], iteration_bounds = array<i64: 1>, scalar_prefetch = 0 : i64, scratch_operands = 0 : i64, tpu.core_type = #tpu.core_type<tc>, window_params = [{transform_indices = @transform_0, window_bounds = array<i64: 1>}, {transform_indices = @transform_1, window_bounds = array<i64: 2, 32>}, {transform_indices = @transform_2, window_bounds = array<i64: 2, 32>}, {pipeline_mode = #tpu.pipeline_mode<synchronous>, transform_indices = @transform_3, window_bounds = array<i64: 2, 32>}, {pipeline_mode = #tpu.pipeline_mode<synchronous>, transform_indices = @transform_4, window_bounds = array<i64: 2, 32>}, {transform_indices = @transform_5, window_bounds = array<i64: 1, 1, 128>}]} {
    %c0 = arith.constant 0 : index
    %0 = memref.load %arg1[%c0] : memref<1xf32, #tpu.memory_space<smem>>
    %c0_0 = arith.constant 0 : index
    %c0_1 = arith.constant 0 : index
    %1 = vector.load %arg2[%c0_0, %c0_1] : memref<2x32xbf16, #tpu.memory_space<vmem>>, vector<2x32xbf16>
    %c0_2 = arith.constant 0 : index
    %c0_3 = arith.constant 0 : index
    %2 = vector.load %arg3[%c0_2, %c0_3] : memref<2x32xbf16, #tpu.memory_space<vmem>>, vector<2x32xbf16>
    %3 = arith.extf %1 : vector<2x32xbf16> to vector<2x32xf32>
    %4 = vector.broadcast %0 : f32 to vector<2x32xf32>
    %5 = arith.mulf %3, %4 : vector<2x32xf32>
    %6 = arith.truncf %5 : vector<2x32xf32> to vector<2x32xbf16>
    %7 = arith.extf %2 : vector<2x32xbf16> to vector<2x32xf32>
    %8 = vector.broadcast %0 : f32 to vector<2x32xf32>
    %9 = arith.mulf %7, %8 : vector<2x32xf32>
    %10 = arith.truncf %9 : vector<2x32xf32> to vector<2x32xbf16>
    %c0_4 = arith.constant 0 : index
    %c0_5 = arith.constant 0 : index
    %11 = vector.load %arg5[%c0_4, %c0_5] : memref<2x32xbf16, #tpu.memory_space<vmem>>, vector<2x32xbf16>
    %cst = arith.constant dense<0.000000e+00> : vector<2x2xf32>
    %12 = tpu.matmul %6, %11, %cst {dimension_numbers = #tpu.dot_dimension_numbers<[1], [1], [0], [0], [0, 0, 1, 0], [], []>} : vector<2x32xbf16>, vector<2x32xbf16>, vector<2x2xf32> -> vector<2x2xf32>
    %c0_6 = arith.constant 0 : index
    %c0_7 = arith.constant 0 : index
    %13 = vector.load %arg4[%c0_6, %c0_7] : memref<2x32xbf16, #tpu.memory_space<vmem>>, vector<2x32xbf16>
    %cst_8 = arith.constant dense<0.000000e+00> : vector<2x2xf32>
    %14 = tpu.matmul %10, %13, %cst_8 {dimension_numbers = #tpu.dot_dimension_numbers<[1], [1], [0], [0], [0, 0, 1, 0], [], []>} : vector<2x32xbf16>, vector<2x32xbf16>, vector<2x2xf32> -> vector<2x2xf32>
    %15 = arith.extf %6 : vector<2x32xbf16> to vector<2x32xf32>
    %16 = arith.extf %2 : vector<2x32xbf16> to vector<2x32xf32>
    %17 = arith.mulf %15, %16 : vector<2x32xf32>
    %cst_9 = arith.constant dense<0.000000e+00> : vector<2xf32>
    %18 = vector.multi_reduction <add>, %17, %cst_9 [1] : vector<2x32xf32> to vector<2xf32>
    %19 = vector.shape_cast %18 : vector<2xf32> to vector<2x1xf32>
    %cst_10 = arith.constant dense<0xFF800000> : vector<2xf32>
    %20 = vector.multi_reduction <maximumf>, %12, %cst_10 [1] : vector<2x2xf32> to vector<2xf32>
    %21 = vector.shape_cast %20 : vector<2xf32> to vector<2x1xf32>
    %22 = vector.broadcast %21 : vector<2x1xf32> to vector<2x2xf32>
    %23 = arith.subf %12, %22 : vector<2x2xf32>
    %24 = math.exp %23 : vector<2x2xf32>
    %cst_11 = arith.constant dense<0.000000e+00> : vector<2xf32>
    %25 = vector.multi_reduction <add>, %24, %cst_11 [1] : vector<2x2xf32> to vector<2xf32>
    %26 = vector.shape_cast %25 : vector<2xf32> to vector<2x1xf32>
    %27 = math.log %26 : vector<2x1xf32>
    %28 = arith.addf %21, %27 : vector<2x1xf32>
    %cst_12 = arith.constant dense<0xFF800000> : vector<2xf32>
    %29 = vector.multi_reduction <maximumf>, %14, %cst_12 [1] : vector<2x2xf32> to vector<2xf32>
    %30 = vector.shape_cast %29 : vector<2xf32> to vector<2x1xf32>
    %31 = vector.broadcast %30 : vector<2x1xf32> to vector<2x2xf32>
    %32 = arith.subf %14, %31 : vector<2x2xf32>
    %33 = math.exp %32 : vector<2x2xf32>
    %cst_13 = arith.constant dense<0.000000e+00> : vector<2xf32>
    %34 = vector.multi_reduction <add>, %33, %cst_13 [1] : vector<2x2xf32> to vector<2xf32>
    %35 = vector.shape_cast %34 : vector<2xf32> to vector<2x1xf32>
    %36 = math.log %35 : vector<2x1xf32>
    %37 = arith.addf %30, %36 : vector<2x1xf32>
    %c2_i32 = arith.constant 2 : i32
    %38 = arith.muli %arg0, %c2_i32 : i32
    %39 = tpu.iota {dimensions = array<i32: 0>} : vector<2x1xi32>
    %40 = vector.broadcast %38 : i32 to vector<2x1xi32>
    %41 = arith.addi %40, %39 : vector<2x1xi32>
    %c2_i32_14 = arith.constant 2 : i32
    %42 = vector.broadcast %c2_i32_14 : i32 to vector<2x1xi32>
    %43 = arith.cmpi slt, %41, %42 : vector<2x1xi32>
    %44 = arith.addf %28, %37 : vector<2x1xf32>
    %cst_15 = arith.constant 2.000000e+00 : f32
    %45 = vector.broadcast %cst_15 : f32 to vector<2x1xf32>
    %46 = arith.mulf %45, %19 : vector<2x1xf32>
    %47 = arith.subf %44, %46 : vector<2x1xf32>
    %cst_16 = arith.constant 0.000000e+00 : f32
    %48 = vector.broadcast %cst_16 : f32 to vector<2x1xf32>
    %49 = arith.select %43, %47, %48 : vector<2x1xi1>, vector<2x1xf32>
    %50 = tpu.iota {dimensions = array<i32: 2>} : vector<1x1x128xi32>
    %c0_i32 = arith.constant 0 : i32
    %51 = vector.broadcast %c0_i32 : i32 to vector<1x1x128xi32>
    %52 = arith.cmpi eq, %50, %51 : vector<1x1x128xi32>
    %53 = vector.shape_cast %49 : vector<2x1xf32> to vector<1x2x1xf32>
    %cst_17 = arith.constant dense<0.000000e+00> : vector<1xf32>
    %54 = vector.multi_reduction <add>, %53, %cst_17 [1, 2] : vector<1x2x1xf32> to vector<1xf32>
    %55 = vector.shape_cast %54 : vector<1xf32> to vector<1x1x1xf32>
    %56 = vector.extract %55[0, 0, 0] : f32 from vector<1x1x1xf32>
    %cst_18 = arith.constant 0.000000e+00 : f32
    %57 = vector.broadcast %56 : f32 to vector<1x1x128xf32>
    %58 = vector.broadcast %cst_18 : f32 to vector<1x1x128xf32>
    %59 = arith.select %52, %57, %58 : vector<1x1x128xi1>, vector<1x1x128xf32>
    %c0_19 = arith.constant 0 : index
    %c0_20 = arith.constant 0 : index
    %c0_21 = arith.constant 0 : index
    %60 = vector.load %arg6[%c0_19, %c0_20, %c0_21] : memref<1x1x128xf32, #tpu.memory_space<vmem>>, vector<1x1x128xf32>
    tpu.vector_store %arg6[%c0_19, %c0_20, %c0_21], %59 {strides = array<i32>} : memref<1x1x128xf32, #tpu.memory_space<vmem>>, vector<1x1x128xf32>,
    return
  }
  func.func @transform_0(%arg0: i32) -> i32 {
    %c0_i32 = arith.constant 0 : i32
    %c0_i32_0 = arith.constant 0 : i32
    return %c0_i32 : i32
  }
  func.func @transform_1(%arg0: i32) -> (i32, i32) {
    %c0_i32 = arith.constant 0 : i32
    %c0_i32_0 = arith.constant 0 : i32
    return %arg0, %c0_i32 : i32, i32
  }
  func.func @transform_2(%arg0: i32) -> (i32, i32) {
    %c0_i32 = arith.constant 0 : i32
    %c0_i32_0 = arith.constant 0 : i32
    return %arg0, %c0_i32 : i32, i32
  }
  func.func @transform_3(%arg0: i32) -> (i32, i32) {
    %c0_i32 = arith.constant 0 : i32
    %c0_i32_0 = arith.constant 0 : i32
    %c0_i32_1 = arith.constant 0 : i32
    return %c0_i32, %c0_i32_0 : i32, i32
  }
  func.func @transform_4(%arg0: i32) -> (i32, i32) {
    %c0_i32 = arith.constant 0 : i32
    %c0_i32_0 = arith.constant 0 : i32
    %c0_i32_1 = arith.constant 0 : i32
    return %c0_i32, %c0_i32_0 : i32, i32
  }
  func.func @transform_5(%arg0: i32) -> (i32, i32, i32) {
    %c0_i32 = arith.constant 0 : i32
    %c0_i32_0 = arith.constant 0 : i32
    %c0_i32_1 = arith.constant 0 : i32
    return %arg0, %c0_i32, %c0_i32_0 : i32, i32, i32
  }
}

</mosaic_0001>

<llo_original>
// kernel: tpu_custom_call.1
$region0: #{tpu_custom_call.1}
  #allocation0 [shape = 'u32[]', space=smem, size = 0x4, offset = 0x4, fixed_abs, tag = 'smem constant byte address 0x4 - core index']
  #allocation1 [shape = 'u32[144,128]{1,0:T(1,128)}', space=vmem, size = 0x12000, scoped, tag = 'internal scratch']
  #allocation2 [shape = 'f32[1]{0:T(128)S(6)}', space=smem, size = 0x200, scoped, tag = 'scoped memory for tpu_custom_call.1']
  %s0 = inlined_call_operand.<no memory space> [shape: f32[1], index: 0, kind: input, shape index: {}]
  %s1 = inlined_call_operand.vmem [shape: bf16[2,32], index: 1, kind: input, shape index: {}]
  %s2 = inlined_call_operand.vmem [shape: bf16[2,32], index: 2, kind: input, shape index: {}]
  %s3 = inlined_call_operand.vmem [shape: bf16[2,32], index: 3, kind: input, shape index: {}]
  %s4 = inlined_call_operand.vmem [shape: bf16[2,32], index: 4, kind: input, shape index: {}]
  %s5 = inlined_call_operand.hbm [shape: f32[1,1,128], index: 5, kind: output, shape index: {}]
  %s6 = sld [smem:[#allocation0]]
  $region30: #{tpu_custom_call.1} parent=0
    _
  %s8 = ssub.s32 1, %s6
  %s9 = scalar_select 0, %s8, %s6
  %10 = sst [smem:[#allocation2]] %s0
  $region1: #{tpu_custom_call.1} parent=0
    #allocation3 [shape = 'u8[512]{0}', space=vmem, size = 0x400, scoped, tag = 'output window, operand 0, single buffered']
    #allocation4 [shape = 's32[1]{0}', space=sflag, size = 0x4, scoped, tag = 'scoped memory for tpu_custom_call.1']
    %11 = vsyncpa [#allocation4], 0
    // Predicated region
    $region2: #{tpu_custom_call.1} parent=1 // pred_check
      _
    $region3: #{tpu_custom_call.1} parent=1 // pred_check_branch
      %13 = sbr.rel (0) target = $region5
    $region4: #{tpu_custom_call.1} parent=1 // pred_region
      _
    $region5: #{tpu_custom_call.1} parent=1 // pred_fallthru
      _
    // Predicated region
    $region6: #{tpu_custom_call.1} parent=1 // pred_check
      _
    $region7: #{tpu_custom_call.1} parent=1 // pred_check_branch
      %15 = sbr.rel (0) target = $region9
    $region8: #{tpu_custom_call.1} parent=1 // pred_region
      _
    $region9: #{tpu_custom_call.1} parent=1 // pred_fallthru
      _
    // Predicated region
    $region10: #{tpu_custom_call.1} parent=1 // pred_check
      _
    $region11: #{tpu_custom_call.1} parent=1 // pred_check_branch
      %17 = sbr.rel (0) target = $region13
    $region12: #{tpu_custom_call.1} parent=1 // pred_region
      _
    $region13: #{tpu_custom_call.1} parent=1 // pred_fallthru
      _
    // Predicated region
    $region14: #{tpu_custom_call.1} parent=1 // pred_check
      _
    $region15: #{tpu_custom_call.1} parent=1 // pred_check_branch
      %19 = sbr.rel (0) target = $region17
    $region16: #{tpu_custom_call.1} parent=1 // pred_region
      _
    $region17: #{tpu_custom_call.1} parent=1 // pred_fallthru
      _
    // Predicated region
    $region18: #{tpu_custom_call.1} parent=1 // pred_check
      _
    $region19: #{tpu_custom_call.1} parent=1 // pred_check_branch
      %21 = sbr.rel (0) target = $region21
    $region20: #{tpu_custom_call.1} parent=1 // pred_region
      _
    $region21: #{tpu_custom_call.1} parent=1 // pred_fallthru
      _
    %s23 = sld [smem:[#allocation2]]
    %v24 = vld [vmem:[%s1] sm:$0x1]
    %v25 = vld [vmem:[%s2] sm:$0x1]
    %v26 = vunpack.c.l.bf16 %v24
    %v27 = vstv %s23
    %v28 = vmul.f32 %v26, %v27
    %v29 = vpack.c.bf16 %v28, %v28
    %v30 = vunpack.c.l.bf16 %v25
    %v31 = vmul.f32 %v30, %v27
    %v32 = vpack.c.bf16 %v31, %v31
    %v33 = vld [vmem:[%s4] sm:$0x1]
    %vm34 = vcmask 261120
    %v36 = vsel %vm34, %v29, 0
    %v39 = vsel %vm34, %v33, 0
    %41 = vmatprep.subr.bf16.mxu0 0
    %42 = vmatpush1.bf16.xpose.msra.mxu0 %v39
    %43 = vmatprep.subr.bf16.mxu0 0
    %44 = vmatpush1.bf16.xpose.msra.mxu0 0
    %45 = vmatprep.subr.bf16.mxu0 0
    %46 = vmatpush1.bf16.xpose.msra.mxu0 0
    %47 = vmatprep.subr.bf16.mxu0 0
    %48 = vmatpush1.bf16.xpose.msra.mxu0 0
    %49 = vmatprep.subr.bf16.mxu0 0
    %50 = vmatpush1.bf16.xpose.msra.mxu0 0
    %51 = vmatprep.subr.bf16.mxu0 0
    %52 = vmatpush1.bf16.xpose.msra.mxu0 0
    %53 = vmatprep.subr.bf16.mxu0 0
    %54 = vmatpush1.bf16.xpose.msra.mxu0 0
    %55 = vmatprep.subr.bf16.mxu0 0
    %56 = vmatpush1.bf16.xpose.msra.mxu0 0
    %57 = vmatprep.subr.bf16.mxu0 0
    %58 = vmatpush1.bf16.xpose.msra.mxu0 0
    %59 = vmatprep.subr.bf16.mxu0 0
    %60 = vmatpush1.bf16.xpose.msra.mxu0 0
    %61 = vmatprep.subr.bf16.mxu0 0
    %62 = vmatpush1.bf16.xpose.msra.mxu0 0
    %63 = vmatprep.subr.bf16.mxu0 0
    %64 = vmatpush1.bf16.xpose.msra.mxu0 0
    %65 = vmatprep.subr.bf16.mxu0 0
    %66 = vmatpush1.bf16.xpose.msra.mxu0 0
    %67 = vmatprep.subr.bf16.mxu0 0
    %68 = vmatpush1.bf16.xpose.msra.mxu0 0
    %69 = vmatprep.subr.bf16.mxu0 0
    %70 = vmatpush1.bf16.xpose.msra.mxu0 0
    %71 = vmatprep.subr.bf16.mxu0 0
    %72 = vmatpush1.bf16.xpose.msra.mxu0 0
    %73 = vmatprep.mubr.bf16.mxu0 0
    %74 = vmatmul.mubr.bf16.gmra.mrb[0].mxu0 %v36
    %v75 = vpop.f32.mrb[0].mxu0
    %v76 = vadd.f32 0.0, %v75
    %v77 = vpop.f32.mrb[0].mxu0
    %v78 = vpop.f32.mrb[0].mxu0
    %v79 = vpop.f32.mrb[0].mxu0
    %80 = vdwg.mxu0
    %v81 = vld [vmem:[%s3] sm:$0x1]
    %v83 = vsel %vm34, %v32, 0
    %v86 = vsel %vm34, %v81, 0
    %88 = vmatprep.subr.bf16.mxu0 0
    %89 = vmatpush1.bf16.xpose.msra.mxu0 %v86
    %90 = vmatprep.subr.bf16.mxu0 0
    %91 = vmatpush1.bf16.xpose.msra.mxu0 0
    %92 = vmatprep.subr.bf16.mxu0 0
    %93 = vmatpush1.bf16.xpose.msra.mxu0 0
    %94 = vmatprep.subr.bf16.mxu0 0
    %95 = vmatpush1.bf16.xpose.msra.mxu0 0
    %96 = vmatprep.subr.bf16.mxu0 0
    %97 = vmatpush1.bf16.xpose.msra.mxu0 0
    %98 = vmatprep.subr.bf16.mxu0 0
    %99 = vmatpush1.bf16.xpose.msra.mxu0 0
    %100 = vmatprep.subr.bf16.mxu0 0
    %101 = vmatpush1.bf16.xpose.msra.mxu0 0
    %102 = vmatprep.subr.bf16.mxu0 0
    %103 = vmatpush1.bf16.xpose.msra.mxu0 0
    %104 = vmatprep.subr.bf16.mxu0 0
    %105 = vmatpush1.bf16.xpose.msra.mxu0 0
    %106 = vmatprep.subr.bf16.mxu0 0
    %107 = vmatpush1.bf16.xpose.msra.mxu0 0
    %108 = vmatprep.subr.bf16.mxu0 0
    %109 = vmatpush1.bf16.xpose.msra.mxu0 0
    %110 = vmatprep.subr.bf16.mxu0 0
    %111 = vmatpush1.bf16.xpose.msra.mxu0 0
    %112 = vmatprep.subr.bf16.mxu0 0
    %113 = vmatpush1.bf16.xpose.msra.mxu0 0
    %114 = vmatprep.subr.bf16.mxu0 0
    %115 = vmatpush1.bf16.xpose.msra.mxu0 0
    %116 = vmatprep.subr.bf16.mxu0 0
    %117 = vmatpush1.bf16.xpose.msra.mxu0 0
    %118 = vmatprep.subr.bf16.mxu0 0
    %119 = vmatpush1.bf16.xpose.msra.mxu0 0
    %120 = vmatprep.mubr.bf16.mxu0 0
    %121 = vmatmul.mubr.bf16.gmra.mrb[0].mxu0 %v83
    %v122 = vpop.f32.mrb[0].mxu0
    %v123 = vadd.f32 0.0, %v122
    %v124 = vpop.f32.mrb[0].mxu0
    %v125 = vpop.f32.mrb[0].mxu0
    %v126 = vpop.f32.mrb[0].mxu0
    %127 = vdwg.mxu0
    %v128 = vunpack.c.l.bf16 %v29
    %v129 = vmul.f32 %v128, %v30
    %vm130 = vcmask 254976
    %v131 = vsel %vm130, %v129, 0.0
    %132 = vadd.xlane.f32.xlu0 %v131
    %v133 = vpop.xlane.xlu0 %132
    %vm134 = vcmask 9216
    %v135 = vsel %vm134, %v76, -inf
    %136 = vmax.xlane.f32.xlu0 %v135
    %v137 = vpop.xlane.xlu0 %136
    %v138 = vsub.f32 %v76, %v137
    %v139 = vmul.f32 %v138, 1.442695
    %v140 = vpow.pop %v139
    %v141 = vsel %vm134, %v140, 0.0
    %142 = vadd.xlane.f32.xlu0 %v141
    %v143 = vpop.xlane.xlu0 %142
    %v144 = vlog2.pop %v143
    %v145 = vmul.f32 %v144, 0.6931472
    %v146 = vadd.f32 %v137, %v145
    %v147 = vsel %vm134, %v123, -inf
    %148 = vmax.xlane.f32.xlu0 %v147
    %v149 = vpop.xlane.xlu0 %148
    %v150 = vsub.f32 %v123, %v149
    %v151 = vmul.f32 %v150, 1.442695
    %v152 = vpow.pop %v151
    %v153 = vsel %vm134, %v152, 0.0
    %154 = vadd.xlane.f32.xlu0 %v153
    %v155 = vpop.xlane.xlu0 %154
    %v156 = vlog2.pop %v155
    %v157 = vmul.f32 %v156, 0.6931472
    %v158 = vadd.f32 %v149, %v157
    %s159 = smul.u32 0, 2
    %v160 = vlaneseq
    %v161 = vshrl.u32 %v160, 7
    %v162 = vstv %s159
    %v163 = vadd.s32 %v162, %v161
    %vm164 = vcmp.lt.s32.totalorder %v163, 2
    %v165 = vadd.f32 %v146, %v158
    %v166 = vmul.f32 %v133, 2.0
    %v167 = vsub.f32 %v165, %v166
    %v168 = vsel %vm164, %v167, 0.0
    %v169 = vlaneseq
    %v170 = vand.u32 %v169, 127
    %vm171 = vcmp.eq.s32.totalorder %v170, 0
    %vm172 = vcmask 1024
    %v173 = vsel %vm172, %v168, 0.0
    %174 = vadd.xlane.f32.xlu0 %v173
    %v175 = vpop.xlane.xlu0 %174
    %v176 = vrot.slane %v175, 4
    %v177 = vadd.f32 %v175, %v176
    %v178 = vrot.slane %v177, 2
    %v179 = vadd.f32 %v177, %v178
    %v180 = vrot.slane %v179, 1
    %v181 = vadd.f32 %v179, %v180
    %s182 = vtos %v181
    %v183 = vstv %s182
    %v184 = vsel %vm171, %v183, 0.0
    %185 = vst [vmem:[#allocation3] sm:$0x1] %v184
    // Predicated region
    $region22: #{tpu_custom_call.1} parent=1 // pred_check
      _
    $region23: #{tpu_custom_call.1} parent=1 // pred_check_branch
      %187 = sbr.rel (0) target = $region25
    $region24: #{tpu_custom_call.1} parent=1 // pred_region
      %s189 = ssub.s32 16, 16
      %190 = vsyncadd [#allocation4], %s189
      %s192 = sshll.u32 [#allocation3], 4
      %s193 = int_to_ptr.vmem [resolvable:$true] %s192
      %195 = dma.vmem_to_hbm [thread:$0]  %s193, 16, %s5, [#allocation4]
    $region25: #{tpu_custom_call.1} parent=1 // pred_fallthru
      _
    // Predicated region
    $region26: #{tpu_custom_call.1} parent=1 // pred_check
      _
    $region27: #{tpu_custom_call.1} parent=1 // pred_check_branch
      %197 = sbr.rel (0) target = $region29
    $region28: #{tpu_custom_call.1} parent=1 // pred_region
      %198 = dma.done [#allocation4], 16
    $region29: #{tpu_custom_call.1} parent=1 // pred_fallthru
      _
    %199 = vsyncpa [#allocation4], 1

</llo_original>
